<compile_context>
chip_gen: v6e
topology: v6e:2x2x1
jax: 0.10.0
libtpu: 0.0.40
codegen_flags: <defaults>
</compile_context>

<pallas_src>
import functools

import jax
import jax.numpy as jnp
from jax.experimental import pallas as pl
from jax.experimental.pallas import tpu as pltpu


def _spectral_mul_kernel(xr_ref, xi_ref, wr_ref, wi_ref, or_ref, oi_ref, *, cin):
    """Blocks: xr/xi (B, Cin, T), wr/wi (Cin, Cout, T), or/oi (B, Cout, T); lanes = T.

    Accumulate over the (compile-time) input-channel axis in vreg values and store each
    output block once — no (B, Cin, Cout, T) intermediate, no per-channel output RMW.
    """

    def term(i):
        xr_i = xr_ref[:, i:i + 1, :]   # (B, 1, T)  ref-view load, zero-cost slice
        xi_i = xi_ref[:, i:i + 1, :]
        wr_i = wr_ref[i:i + 1]         # (1, Cout, T)
        wi_i = wi_ref[i:i + 1]
        return (xr_i * wr_i - xi_i * wi_i,   # real part   -> (B, Cout, T)
                xr_i * wi_i + xi_i * wr_i)   # imag part

    acc_r, acc_i = term(0)
    for i in range(1, cin):            # cin is a Python int -> statically unrolled
        t_r, t_i = term(i)
        acc_r = acc_r + t_r
        acc_i = acc_i + t_i
    or_ref[...] = acc_r                # single lane-dense store per output block
    oi_ref[...] = acc_i


def _choose_tile_l(B, Cin, Cout, L,
                   vmem_budget=24 << 20, acc_budget=128 << 10, max_tile=16384):
    """Pick a lane tile (multiple of 128) and the padded lane extent.

    Constraints per lane:
      * double-buffered f32 VMEM blocks: 2 * 4 * (2*B*Cin + 2*Cin*Cout + 2*B*Cout) bytes
      * f32 accumulators held in vregs:  4 * 2 * B * Cout bytes (<= acc_budget to avoid spills)
    """
    per_lane_vmem = 2 * 4 * (2 * B * Cin + 2 * Cin * Cout + 2 * B * Cout)
    per_lane_acc = 4 * 2 * B * Cout
    t_lanes = min(vmem_budget // per_lane_vmem, acc_budget // per_lane_acc, max_tile)
    t_units = max(1, t_lanes // 128)

    k = (L + 127) // 128               # L in 128-lane units (ceil)
    tile_units = min(t_units, k)
    tile_l = tile_units * 128
    l_pad = ((L + tile_l - 1) // tile_l) * tile_l   # pad so tile divides the lane extent
    return tile_l, l_pad


def _spectral_mul_pallas(xr, xi, wr, wi, *, tile_l):
    """xr/xi: (B, Cin, L) f32; wr/wi: (Cin, Cout, L) f32 -> (B, Cout, L) f32 x2."""
    B, Cin, L = xr.shape
    Cout = wr.shape[1]
    n_tiles = L // tile_l

    x_spec = pl.BlockSpec((B, Cin, tile_l), lambda t: (0, 0, t))
    w_spec = pl.BlockSpec((Cin, Cout, tile_l), lambda t: (0, 0, t))
    o_spec = pl.BlockSpec((B, Cout, tile_l), lambda t: (0, 0, t))

    kernel = functools.partial(_spectral_mul_kernel, cin=Cin)

    # 4 mul + 2 add per (real,imag) pair per output element per input channel, plus
    # the cross-channel accumulation adds.
    flops = (6 * Cin + 2 * (Cin - 1)) * B * Cout * L
    bytes_accessed = 4 * L * (2 * B * Cin + 2 * Cin * Cout + 2 * B * Cout)

    return pl.pallas_call(
        kernel,
        out_shape=(
            jax.ShapeDtypeStruct((B, Cout, L), jnp.float32),
            jax.ShapeDtypeStruct((B, Cout, L), jnp.float32),
        ),
        grid_spec=pltpu.PrefetchScalarGridSpec(
            num_scalar_prefetch=0,
            grid=(n_tiles,),
            in_specs=[x_spec, x_spec, w_spec, w_spec],
            out_specs=[o_spec, o_spec],
        ),
        compiler_params=pltpu.CompilerParams(
            dimension_semantics=("parallel",),
            vmem_limit_bytes=32 << 20,
        ),
        cost_estimate=pl.CostEstimate(flops=flops, transcendentals=0,
                                      bytes_accessed=bytes_accessed),
    )(xr, xi, wr, wi)


@functools.partial(jax.jit, static_argnames=("modes1", "modes2", "modes3"))
def factorized_spectral_conv3d(x, w1, w2, w3, w4, *, modes1, modes2, modes3):
    """Forward pass matching FactorizedSpectralConv3d.forward.

    x : (B, Cin, D1, D2, D3) float32
    w1..w4 : (Cin, Cout, modes1, modes2, modes3) complex64
    returns (B, Cout, D1, D2, D3) float32
    """
    B, Cin, D1, D2, D3 = x.shape
    Cout = w1.shape[1]
    m1, m2, m3 = modes1, modes2, modes3
    if not (m1 <= D1 and m2 <= D2 and m3 <= D3 // 2 + 1):
        raise ValueError("modes exceed the available Fourier modes for this input size")
    M = m1 * m2 * m3
    L = 4 * M

    # FFT (glue, no Pallas equivalent)
    x_ft = jnp.fft.rfftn(x, axes=(-3, -2, -1))  # (B, Cin, D1, D2, D3//2+1) complex64

    corners = (
        x_ft[:, :, :m1, :m2, :m3],
        x_ft[:, :, -m1:, :m2, :m3],
        x_ft[:, :, :m1, -m2:, :m3],
        x_ft[:, :, -m1:, -m2:, :m3],
    )
    # Corner-major lane axis: lanes = [corner0 modes | corner1 | corner2 | corner3].
    x_c = jnp.concatenate([c.reshape(B, Cin, M) for c in corners], axis=-1)          # (B,Cin,L)
    w_c = jnp.concatenate([w.reshape(Cin, Cout, M) for w in (w1, w2, w3, w4)],
                          axis=-1)                                                    # (Cin,Cout,L)
    xr, xi = jnp.real(x_c), jnp.imag(x_c)   # already float32 — no extra astype copies
    wr, wi = jnp.real(w_c), jnp.imag(w_c)

    tile_l, l_pad = _choose_tile_l(B, Cin, Cout, L)

    def pad(a):
        if a.shape[-1] == l_pad:
            return a
        return jnp.pad(a, [(0, 0)] * (a.ndim - 1) + [(0, l_pad - a.shape[-1])])

    out_r, out_i = _spectral_mul_pallas(pad(xr), pad(xi), pad(wr), pad(wi), tile_l=tile_l)

    out_c = jax.lax.complex(out_r[:, :, :L], out_i[:, :, :L])
    out_c = out_c.reshape(B, Cout, 4, m1, m2, m3)

    out_ft = jnp.zeros((B, Cout, D1, D2, D3 // 2 + 1), dtype=jnp.complex64)
    out_ft = out_ft.at[:, :, :m1, :m2, :m3].set(out_c[:, :, 0])
    out_ft = out_ft.at[:, :, -m1:, :m2, :m3].set(out_c[:, :, 1])
    out_ft = out_ft.at[:, :, :m1, -m2:, :m3].set(out_c[:, :, 2])
    out_ft = out_ft.at[:, :, -m1:, -m2:, :m3].set(out_c[:, :, 3])

    # inverse FFT (glue)
    return jnp.fft.irfftn(out_ft, s=(D1, D2, D3), axes=(-3, -2, -1)).astype(jnp.float32)


def _reference(x, w1, w2, w3, w4, m1, m2, m3):
    """Pure-JAX reference of the torch forward (for correctness check)."""
    B, Cin, D1, D2, D3 = x.shape
    Cout = w1.shape[1]
    x_ft = jnp.fft.rfftn(x, axes=(-3, -2, -1))
    out_ft = jnp.zeros((B, Cout, D1, D2, D3 // 2 + 1), dtype=jnp.complex64)
    mul = lambda a, w: jnp.einsum("bixyz,ioxyz->boxyz", a, w)
    out_ft = out_ft.at[:, :, :m1, :m2, :m3].set(mul(x_ft[:, :, :m1, :m2, :m3], w1))
    out_ft = out_ft.at[:, :, -m1:, :m2, :m3].set(mul(x_ft[:, :, -m1:, :m2, :m3], w2))
    out_ft = out_ft.at[:, :, :m1, -m2:, :m3].set(mul(x_ft[:, :, :m1, -m2:, :m3], w3))
    out_ft = out_ft.at[:, :, -m1:, -m2:, :m3].set(mul(x_ft[:, :, -m1:, -m2:, :m3], w4))
    return jnp.fft.irfftn(out_ft, s=(D1, D2, D3), axes=(-3, -2, -1))


if __name__ == "__main__":
    # Small shapes consistent with the module.
    B, Cin, Cout = 2, 4, 4
    D1 = D2 = D3 = 16
    m1 = m2 = m3 = 4
    scale = 1.0 / (Cin * Cout)

    key = jax.random.PRNGKey(0)
    kx, k1, k2, k3, k4 = jax.random.split(key, 5)

    x = jax.random.normal(kx, (B, Cin, D1, D2, D3), dtype=jnp.float32)

    def make_w(k):
        # (Cin, Cout, m1, m2, m3, 2) ~ scale * N(0,1), then view_as_complex
        w = scale * jax.random.normal(k, (Cin, Cout, m1, m2, m3, 2), dtype=jnp.float32)
        return (w[..., 0] + 1j * w[..., 1]).astype(jnp.complex64)

    w1, w2, w3, w4 = make_w(k1), make_w(k2), make_w(k3), make_w(k4)

    out = factorized_spectral_conv3d(x, w1, w2, w3, w4, modes1=m1, modes2=m2, modes3=m3)
    out = jax.block_until_ready(out)

    ref = jax.block_until_ready(_reference(x, w1, w2, w3, w4, m1, m2, m3))
    assert out.shape == (B, Cout, D1, D2, D3)
    assert jnp.allclose(out, ref, rtol=1e-4, atol=1e-5), "mismatch vs reference"

    print("KERNEL_OK")
</pallas_src>

<mosaic_0001>
module attributes {stable_mosaic.version = 11 : i64} {
  func.func @_spectral_mul_kernel(%arg0: i32, %arg1: memref<2x4x256xf32, #tpu.memory_space<vmem>>, %arg2: memref<2x4x256xf32, #tpu.memory_space<vmem>>, %arg3: memref<4x4x256xf32, #tpu.memory_space<vmem>>, %arg4: memref<4x4x256xf32, #tpu.memory_space<vmem>>, %arg5: memref<2x4x256xf32, #tpu.memory_space<vmem>>, %arg6: memref<2x4x256xf32, #tpu.memory_space<vmem>>) attributes {dimension_semantics = [#tpu.dimension_semantics<parallel>], iteration_bounds = array<i64: 1>, scalar_prefetch = 0 : i64, scratch_operands = 0 : i64, tpu.core_type = #tpu.core_type<tc>, window_params = [{transform_indices = @transform_0, window_bounds = array<i64: 2, 4, 256>}, {transform_indices = @transform_1, window_bounds = array<i64: 2, 4, 256>}, {transform_indices = @transform_2, window_bounds = array<i64: 4, 4, 256>}, {transform_indices = @transform_3, window_bounds = array<i64: 4, 4, 256>}, {transform_indices = @transform_4, window_bounds = array<i64: 2, 4, 256>}, {transform_indices = @transform_5, window_bounds = array<i64: 2, 4, 256>}]} {
    %c0 = arith.constant 0 : index
    %c0_0 = arith.constant 0 : index
    %c0_1 = arith.constant 0 : index
    %0 = vector.load %arg1[%c0, %c0_0, %c0_1] : memref<2x4x256xf32, #tpu.memory_space<vmem>>, vector<2x1x256xf32>
    %c0_2 = arith.constant 0 : index
    %c0_3 = arith.constant 0 : index
    %c0_4 = arith.constant 0 : index
    %1 = vector.load %arg2[%c0_2, %c0_3, %c0_4] : memref<2x4x256xf32, #tpu.memory_space<vmem>>, vector<2x1x256xf32>
    %c0_5 = arith.constant 0 : index
    %c0_6 = arith.constant 0 : index
    %c0_7 = arith.constant 0 : index
    %2 = vector.load %arg3[%c0_5, %c0_6, %c0_7] : memref<4x4x256xf32, #tpu.memory_space<vmem>>, vector<1x4x256xf32>
    %c0_8 = arith.constant 0 : index
    %c0_9 = arith.constant 0 : index
    %c0_10 = arith.constant 0 : index
    %3 = vector.load %arg4[%c0_8, %c0_9, %c0_10] : memref<4x4x256xf32, #tpu.memory_space<vmem>>, vector<1x4x256xf32>
    %4 = vector.broadcast %0 : vector<2x1x256xf32> to vector<2x4x256xf32>
    %5 = vector.broadcast %2 : vector<1x4x256xf32> to vector<2x4x256xf32>
    %6 = arith.mulf %4, %5 : vector<2x4x256xf32>
    %7 = vector.broadcast %1 : vector<2x1x256xf32> to vector<2x4x256xf32>
    %8 = vector.broadcast %3 : vector<1x4x256xf32> to vector<2x4x256xf32>
    %9 = arith.mulf %7, %8 : vector<2x4x256xf32>
    %10 = arith.subf %6, %9 : vector<2x4x256xf32>
    %11 = vector.broadcast %0 : vector<2x1x256xf32> to vector<2x4x256xf32>
    %12 = vector.broadcast %3 : vector<1x4x256xf32> to vector<2x4x256xf32>
    %13 = arith.mulf %11, %12 : vector<2x4x256xf32>
    %14 = vector.broadcast %1 : vector<2x1x256xf32> to vector<2x4x256xf32>
    %15 = vector.broadcast %2 : vector<1x4x256xf32> to vector<2x4x256xf32>
    %16 = arith.mulf %14, %15 : vector<2x4x256xf32>
    %17 = arith.addf %13, %16 : vector<2x4x256xf32>
    %c0_11 = arith.constant 0 : index
    %c1 = arith.constant 1 : index
    %c0_12 = arith.constant 0 : index
    %18 = vector.load %arg1[%c0_11, %c1, %c0_12] : memref<2x4x256xf32, #tpu.memory_space<vmem>>, vector<2x1x256xf32>
    %c0_13 = arith.constant 0 : index
    %c1_14 = arith.constant 1 : index
    %c0_15 = arith.constant 0 : index
    %19 = vector.load %arg2[%c0_13, %c1_14, %c0_15] : memref<2x4x256xf32, #tpu.memory_space<vmem>>, vector<2x1x256xf32>
    %c1_16 = arith.constant 1 : index
    %c0_17 = arith.constant 0 : index
    %c0_18 = arith.constant 0 : index
    %20 = vector.load %arg3[%c1_16, %c0_17, %c0_18] : memref<4x4x256xf32, #tpu.memory_space<vmem>>, vector<1x4x256xf32>
    %c1_19 = arith.constant 1 : index
    %c0_20 = arith.constant 0 : index
    %c0_21 = arith.constant 0 : index
    %21 = vector.load %arg4[%c1_19, %c0_20, %c0_21] : memref<4x4x256xf32, #tpu.memory_space<vmem>>, vector<1x4x256xf32>
    %22 = vector.broadcast %18 : vector<2x1x256xf32> to vector<2x4x256xf32>
    %23 = vector.broadcast %20 : vector<1x4x256xf32> to vector<2x4x256xf32>
    %24 = arith.mulf %22, %23 : vector<2x4x256xf32>
    %25 = vector.broadcast %19 : vector<2x1x256xf32> to vector<2x4x256xf32>
    %26 = vector.broadcast %21 : vector<1x4x256xf32> to vector<2x4x256xf32>
    %27 = arith.mulf %25, %26 : vector<2x4x256xf32>
    %28 = arith.subf %24, %27 : vector<2x4x256xf32>
    %29 = vector.broadcast %18 : vector<2x1x256xf32> to vector<2x4x256xf32>
    %30 = vector.broadcast %21 : vector<1x4x256xf32> to vector<2x4x256xf32>
    %31 = arith.mulf %29, %30 : vector<2x4x256xf32>
    %32 = vector.broadcast %19 : vector<2x1x256xf32> to vector<2x4x256xf32>
    %33 = vector.broadcast %20 : vector<1x4x256xf32> to vector<2x4x256xf32>
    %34 = arith.mulf %32, %33 : vector<2x4x256xf32>
    %35 = arith.addf %31, %34 : vector<2x4x256xf32>
    %36 = arith.addf %10, %28 : vector<2x4x256xf32>
    %37 = arith.addf %17, %35 : vector<2x4x256xf32>
    %c0_22 = arith.constant 0 : index
    %c2 = arith.constant 2 : index
    %c0_23 = arith.constant 0 : index
    %38 = vector.load %arg1[%c0_22, %c2, %c0_23] : memref<2x4x256xf32, #tpu.memory_space<vmem>>, vector<2x1x256xf32>
    %c0_24 = arith.constant 0 : index
    %c2_25 = arith.constant 2 : index
    %c0_26 = arith.constant 0 : index
    %39 = vector.load %arg2[%c0_24, %c2_25, %c0_26] : memref<2x4x256xf32, #tpu.memory_space<vmem>>, vector<2x1x256xf32>
    %c2_27 = arith.constant 2 : index
    %c0_28 = arith.constant 0 : index
    %c0_29 = arith.constant 0 : index
    %40 = vector.load %arg3[%c2_27, %c0_28, %c0_29] : memref<4x4x256xf32, #tpu.memory_space<vmem>>, vector<1x4x256xf32>
    %c2_30 = arith.constant 2 : index
    %c0_31 = arith.constant 0 : index
    %c0_32 = arith.constant 0 : index
    %41 = vector.load %arg4[%c2_30, %c0_31, %c0_32] : memref<4x4x256xf32, #tpu.memory_space<vmem>>, vector<1x4x256xf32>
    %42 = vector.broadcast %38 : vector<2x1x256xf32> to vector<2x4x256xf32>
    %43 = vector.broadcast %40 : vector<1x4x256xf32> to vector<2x4x256xf32>
    %44 = arith.mulf %42, %43 : vector<2x4x256xf32>
    %45 = vector.broadcast %39 : vector<2x1x256xf32> to vector<2x4x256xf32>
    %46 = vector.broadcast %41 : vector<1x4x256xf32> to vector<2x4x256xf32>
    %47 = arith.mulf %45, %46 : vector<2x4x256xf32>
    %48 = arith.subf %44, %47 : vector<2x4x256xf32>
    %49 = vector.broadcast %38 : vector<2x1x256xf32> to vector<2x4x256xf32>
    %50 = vector.broadcast %41 : vector<1x4x256xf32> to vector<2x4x256xf32>
    %51 = arith.mulf %49, %50 : vector<2x4x256xf32>
    %52 = vector.broadcast %39 : vector<2x1x256xf32> to vector<2x4x256xf32>
    %53 = vector.broadcast %40 : vector<1x4x256xf32> to vector<2x4x256xf32>
    %54 = arith.mulf %52, %53 : vector<2x4x256xf32>
    %55 = arith.addf %51, %54 : vector<2x4x256xf32>
    %56 = arith.addf %36, %48 : vector<2x4x256xf32>
    %57 = arith.addf %37, %55 : vector<2x4x256xf32>
    %c0_33 = arith.constant 0 : index
    %c3 = arith.constant 3 : index
    %c0_34 = arith.constant 0 : index
    %58 = vector.load %arg1[%c0_33, %c3, %c0_34] : memref<2x4x256xf32, #tpu.memory_space<vmem>>, vector<2x1x256xf32>
    %c0_35 = arith.constant 0 : index
    %c3_36 = arith.constant 3 : index
    %c0_37 = arith.constant 0 : index
    %59 = vector.load %arg2[%c0_35, %c3_36, %c0_37] : memref<2x4x256xf32, #tpu.memory_space<vmem>>, vector<2x1x256xf32>
    %c3_38 = arith.constant 3 : index
    %c0_39 = arith.constant 0 : index
    %c0_40 = arith.constant 0 : index
    %60 = vector.load %arg3[%c3_38, %c0_39, %c0_40] : memref<4x4x256xf32, #tpu.memory_space<vmem>>, vector<1x4x256xf32>
    %c3_41 = arith.constant 3 : index
    %c0_42 = arith.constant 0 : index
    %c0_43 = arith.constant 0 : index
    %61 = vector.load %arg4[%c3_41, %c0_42, %c0_43] : memref<4x4x256xf32, #tpu.memory_space<vmem>>, vector<1x4x256xf32>
    %62 = vector.broadcast %58 : vector<2x1x256xf32> to vector<2x4x256xf32>
    %63 = vector.broadcast %60 : vector<1x4x256xf32> to vector<2x4x256xf32>
    %64 = arith.mulf %62, %63 : vector<2x4x256xf32>
    %65 = vector.broadcast %59 : vector<2x1x256xf32> to vector<2x4x256xf32>
    %66 = vector.broadcast %61 : vector<1x4x256xf32> to vector<2x4x256xf32>
    %67 = arith.mulf %65, %66 : vector<2x4x256xf32>
    %68 = arith.subf %64, %67 : vector<2x4x256xf32>
    %69 = vector.broadcast %58 : vector<2x1x256xf32> to vector<2x4x256xf32>
    %70 = vector.broadcast %61 : vector<1x4x256xf32> to vector<2x4x256xf32>
    %71 = arith.mulf %69, %70 : vector<2x4x256xf32>
    %72 = vector.broadcast %59 : vector<2x1x256xf32> to vector<2x4x256xf32>
    %73 = vector.broadcast %60 : vector<1x4x256xf32> to vector<2x4x256xf32>
    %74 = arith.mulf %72, %73 : vector<2x4x256xf32>
    %75 = arith.addf %71, %74 : vector<2x4x256xf32>
    %76 = arith.addf %56, %68 : vector<2x4x256xf32>
    %77 = arith.addf %57, %75 : vector<2x4x256xf32>
    %c0_44 = arith.constant 0 : index
    %c0_45 = arith.constant 0 : index
    %c0_46 = arith.constant 0 : index
    %78 = vector.load %arg5[%c0_44, %c0_45, %c0_46] : memref<2x4x256xf32, #tpu.memory_space<vmem>>, vector<2x4x256xf32>
    tpu.vector_store %arg5[%c0_44, %c0_45, %c0_46], %76 {strides = array<i32>} : memref<2x4x256xf32, #tpu.memory_space<vmem>>, vector<2x4x256xf32>,
    %c0_47 = arith.constant 0 : index
    %c0_48 = arith.constant 0 : index
    %c0_49 = arith.constant 0 : index
    %79 = vector.load %arg6[%c0_47, %c0_48, %c0_49] : memref<2x4x256xf32, #tpu.memory_space<vmem>>, vector<2x4x256xf32>
    tpu.vector_store %arg6[%c0_47, %c0_48, %c0_49], %77 {strides = array<i32>} : memref<2x4x256xf32, #tpu.memory_space<vmem>>, vector<2x4x256xf32>,
    return
  }
  func.func @transform_0(%arg0: i32) -> (i32, i32, i32) {
    %c0_i32 = arith.constant 0 : i32
    %c0_i32_0 = arith.constant 0 : i32
    %c0_i32_1 = arith.constant 0 : i32
    return %c0_i32, %c0_i32_0, %arg0 : i32, i32, i32
  }
  func.func @transform_1(%arg0: i32) -> (i32, i32, i32) {
    %c0_i32 = arith.constant 0 : i32
    %c0_i32_0 = arith.constant 0 : i32
    %c0_i32_1 = arith.constant 0 : i32
    return %c0_i32, %c0_i32_0, %arg0 : i32, i32, i32
  }
  func.func @transform_2(%arg0: i32) -> (i32, i32, i32) {
    %c0_i32 = arith.constant 0 : i32
    %c0_i32_0 = arith.constant 0 : i32
    %c0_i32_1 = arith.constant 0 : i32
    return %c0_i32, %c0_i32_0, %arg0 : i32, i32, i32
  }
  func.func @transform_3(%arg0: i32) -> (i32, i32, i32) {
    %c0_i32 = arith.constant 0 : i32
    %c0_i32_0 = arith.constant 0 : i32
    %c0_i32_1 = arith.constant 0 : i32
    return %c0_i32, %c0_i32_0, %arg0 : i32, i32, i32
  }
  func.func @transform_4(%arg0: i32) -> (i32, i32, i32) {
    %c0_i32 = arith.constant 0 : i32
    %c0_i32_0 = arith.constant 0 : i32
    %c0_i32_1 = arith.constant 0 : i32
    return %c0_i32, %c0_i32_0, %arg0 : i32, i32, i32
  }
  func.func @transform_5(%arg0: i32) -> (i32, i32, i32) {
    %c0_i32 = arith.constant 0 : i32
    %c0_i32_0 = arith.constant 0 : i32
    %c0_i32_1 = arith.constant 0 : i32
    return %c0_i32, %c0_i32_0, %arg0 : i32, i32, i32
  }
}

</mosaic_0001>

<llo_original>
// kernel: custom-call
$region0: #{custom-call}
  %s0 = inlined_call_operand.hbm [shape: c64[4,4,4,4,4], index: 0, kind: input, shape index: {}]
  %s1 = inlined_call_operand.vmem [shape: f32[4,4,4,4,4], index: 1, kind: output, shape index: {}]
  $region1: #{custom-call} parent=0
    #allocation0 [shape = 's32[1]{0}', space=sflag, size = 0x4, scoped, tag = 'scoped memory for custom-call']
    %2 = vsyncpa [#allocation0], 0
    %s3 = sshll.u32 %s1, 4
    %s4 = int_to_ptr.vmem [resolvable:$true] %s3
    %6 = dma.hbm_to_vmem [thread:$0]  %s0, 4096, %s4, [#allocation0]
    %7 = dma.done [#allocation0], 4096
    %8 = vsyncpa [#allocation0], 1

// kernel: custom-call.1
$region0: #{custom-call.1}
  %s0 = inlined_call_operand.hbm [shape: c64[4,4,4,4,4], index: 0, kind: input, shape index: {}]
  %s1 = inlined_call_operand.vmem [shape: f32[4,4,4,4,4], index: 1, kind: output, shape index: {}]
  %s2 = scalar_lea.hbm %s0, 4096
  $region1: #{custom-call.1} parent=0
    #allocation0 [shape = 's32[1]{0}', space=sflag, size = 0x4, scoped, tag = 'scoped memory for custom-call.1']
    %3 = vsyncpa [#allocation0], 0
    %s4 = sshll.u32 %s1, 4
    %s5 = int_to_ptr.vmem [resolvable:$true] %s4
    %7 = dma.hbm_to_vmem [thread:$0]  %s2, 4096, %s5, [#allocation0]
    %8 = dma.done [#allocation0], 4096
    %9 = vsyncpa [#allocation0], 1

// kernel: factorized_spectral_conv3d.1
$region0: #{factorized_spectral_conv3d.1}
  #allocation0 [shape = 'u32[]', space=smem, size = 0x4, offset = 0x4, fixed_abs, tag = 'smem constant byte address 0x4 - core index']
  #allocation1 [shape = 'u32[144,128]{1,0:T(1,128)}', space=vmem, size = 0x12000, scoped, tag = 'internal scratch']
  %s0 = inlined_call_operand.vmem [shape: f32[2,4,256], index: 0, kind: input, shape index: {}]
  %s1 = inlined_call_operand.vmem [shape: f32[2,4,256], index: 1, kind: input, shape index: {}]
  %s2 = inlined_call_operand.vmem [shape: f32[4,4,256], index: 2, kind: input, shape index: {}]
  %s3 = inlined_call_operand.vmem [shape: f32[4,4,256], index: 3, kind: input, shape index: {}]
  %s4 = inlined_call_operand.vmem [shape: f32[2,4,256], index: 4, kind: output, shape index: {0}]
  %s5 = inlined_call_operand.vmem [shape: f32[2,4,256], index: 5, kind: output, shape index: {1}]
  %6 = xla_tuple %s4, %s5
  %s7 = sld [smem:[#allocation0]]
  $region34: #{factorized_spectral_conv3d.1} parent=0
    _
  %s9 = ssub.s32 1, %s7
  %s10 = scalar_select 0, %s9, %s7
  // Predicated region
  $region2: #{factorized_spectral_conv3d.1} parent=0 // pred_check
    _
  $region3: #{factorized_spectral_conv3d.1} parent=0 // pred_check_branch
    %12 = sbr.rel (0) target = $region5
  $region4: #{factorized_spectral_conv3d.1} parent=0 // pred_region
    _
  $region5: #{factorized_spectral_conv3d.1} parent=0 // pred_fallthru
    _
  // Predicated region
  $region6: #{factorized_spectral_conv3d.1} parent=0 // pred_check
    _
  $region7: #{factorized_spectral_conv3d.1} parent=0 // pred_check_branch
    %14 = sbr.rel (0) target = $region9
  $region8: #{factorized_spectral_conv3d.1} parent=0 // pred_region
    _
  $region9: #{factorized_spectral_conv3d.1} parent=0 // pred_fallthru
    _
  // Predicated region
  $region10: #{factorized_spectral_conv3d.1} parent=0 // pred_check
    _
  $region11: #{factorized_spectral_conv3d.1} parent=0 // pred_check_branch
    %16 = sbr.rel (0) target = $region13
  $region12: #{factorized_spectral_conv3d.1} parent=0 // pred_region
    _
  $region13: #{factorized_spectral_conv3d.1} parent=0 // pred_fallthru
    _
  // Predicated region
  $region14: #{factorized_spectral_conv3d.1} parent=0 // pred_check
    _
  $region15: #{factorized_spectral_conv3d.1} parent=0 // pred_check_branch
    %18 = sbr.rel (0) target = $region17
  $region16: #{factorized_spectral_conv3d.1} parent=0 // pred_region
    _
  $region17: #{factorized_spectral_conv3d.1} parent=0 // pred_fallthru
    _
  %v19 = vld [vmem:[%s0] ss:$4 sm:$0x3]
  %s20 = scalar_lea.vmem %s0, 8
  %v21 = vld [vmem:[%s20] ss:$4 sm:$0x3]
  %v22 = vld [vmem:[%s1] ss:$4 sm:$0x3]
  %s23 = scalar_lea.vmem %s1, 8
  %v24 = vld [vmem:[%s23] ss:$4 sm:$0x3]
  %v25 = vld [vmem:[%s2] sm:$0xff]
  %v26 = vld [vmem:[%s3] sm:$0xff]
  %v29 = vlaneseq
  %v30 = vshrl.u32 %v29, 7
  %v31 = vsub.s32 0, %v30
  %v32 = vrot.slane %v19, %v31
  %v33 = vlaneseq
  %v34 = vshrl.u32 %v33, 7
  %v35 = vsub.s32 1, %v34
  %v36 = vrot.slane %v19, %v35
  %v37 = vlaneseq
  %v38 = vshrl.u32 %v37, 7
  %v39 = vsub.s32 0, %v38
  %v40 = vrot.slane %v21, %v39
  %v41 = vlaneseq
  %v42 = vshrl.u32 %v41, 7
  %v43 = vsub.s32 1, %v42
  %v44 = vrot.slane %v21, %v43
  %v50 = vcombine.high %v25, %v25
  %v52 = vmul.f32 %v32, %v25
  %v53 = vmul.f32 %v36, %v50
  %v54 = vmul.f32 %v40, %v25
  %v55 = vmul.f32 %v44, %v50
  %v58 = vlaneseq
  %v59 = vshrl.u32 %v58, 7
  %v60 = vsub.s32 0, %v59
  %v61 = vrot.slane %v22, %v60
  %v62 = vlaneseq
  %v63 = vshrl.u32 %v62, 7
  %v64 = vsub.s32 1, %v63
  %v65 = vrot.slane %v22, %v64
  %v66 = vlaneseq
  %v67 = vshrl.u32 %v66, 7
  %v68 = vsub.s32 0, %v67
  %v69 = vrot.slane %v24, %v68
  %v70 = vlaneseq
  %v71 = vshrl.u32 %v70, 7
  %v72 = vsub.s32 1, %v71
  %v73 = vrot.slane %v24, %v72
  %v79 = vcombine.high %v26, %v26
  %v81 = vmul.f32 %v61, %v26
  %v82 = vmul.f32 %v65, %v79
  %v83 = vmul.f32 %v69, %v26
  %v84 = vmul.f32 %v73, %v79
  %v85 = vsub.f32 %v52, %v81
  %v86 = vsub.f32 %v53, %v82
  %v87 = vsub.f32 %v54, %v83
  %v88 = vsub.f32 %v55, %v84
  %v89 = vmul.f32 %v32, %v26
  %v90 = vmul.f32 %v36, %v79
  %v91 = vmul.f32 %v40, %v26
  %v92 = vmul.f32 %v44, %v79
  %v93 = vmul.f32 %v61, %v25
  %v94 = vmul.f32 %v65, %v50
  %v95 = vmul.f32 %v69, %v25
  %v96 = vmul.f32 %v73, %v50
  %v97 = vadd.f32 %v89, %v93
  %v98 = vadd.f32 %v90, %v94
  %v99 = vadd.f32 %v91, %v95
  %v100 = vadd.f32 %v92, %v96
  %s101 = scalar_lea.vmem %s0, 1
  %v102 = vld [vmem:[%s101] ss:$4 sm:$0x3]
  %s103 = scalar_lea.vmem %s0, 9
  %v104 = vld [vmem:[%s103] ss:$4 sm:$0x3]
  %s105 = scalar_lea.vmem %s1, 1
  %v106 = vld [vmem:[%s105] ss:$4 sm:$0x3]
  %s107 = scalar_lea.vmem %s1, 9
  %v108 = vld [vmem:[%s107] ss:$4 sm:$0x3]
  %s109 = scalar_lea.vmem %s2, 8
  %v110 = vld [vmem:[%s109] sm:$0xff]
  %s111 = scalar_lea.vmem %s3, 8
  %v112 = vld [vmem:[%s111] sm:$0xff]
  %v115 = vlaneseq
  %v116 = vshrl.u32 %v115, 7
  %v117 = vsub.s32 0, %v116
  %v118 = vrot.slane %v102, %v117
  %v119 = vlaneseq
  %v120 = vshrl.u32 %v119, 7
  %v121 = vsub.s32 1, %v120
  %v122 = vrot.slane %v102, %v121
  %v123 = vlaneseq
  %v124 = vshrl.u32 %v123, 7
  %v125 = vsub.s32 0, %v124
  %v126 = vrot.slane %v104, %v125
  %v127 = vlaneseq
  %v128 = vshrl.u32 %v127, 7
  %v129 = vsub.s32 1, %v128
  %v130 = vrot.slane %v104, %v129
  %v136 = vcombine.high %v110, %v110
  %v138 = vmul.f32 %v118, %v110
  %v139 = vmul.f32 %v122, %v136
  %v140 = vmul.f32 %v126, %v110
  %v141 = vmul.f32 %v130, %v136
  %v144 = vlaneseq
  %v145 = vshrl.u32 %v144, 7
  %v146 = vsub.s32 0, %v145
  %v147 = vrot.slane %v106, %v146
  %v148 = vlaneseq
  %v149 = vshrl.u32 %v148, 7
  %v150 = vsub.s32 1, %v149
  %v151 = vrot.slane %v106, %v150
  %v152 = vlaneseq
  %v153 = vshrl.u32 %v152, 7
  %v154 = vsub.s32 0, %v153
  %v155 = vrot.slane %v108, %v154
  %v156 = vlaneseq
  %v157 = vshrl.u32 %v156, 7
  %v158 = vsub.s32 1, %v157
  %v159 = vrot.slane %v108, %v158
  %v165 = vcombine.high %v112, %v112
  %v167 = vmul.f32 %v147, %v112
  %v168 = vmul.f32 %v151, %v165
  %v169 = vmul.f32 %v155, %v112
  %v170 = vmul.f32 %v159, %v165
  %v171 = vsub.f32 %v138, %v167
  %v172 = vsub.f32 %v139, %v168
  %v173 = vsub.f32 %v140, %v169
  %v174 = vsub.f32 %v141, %v170
  %v175 = vmul.f32 %v118, %v112
  %v176 = vmul.f32 %v122, %v165
  %v177 = vmul.f32 %v126, %v112
  %v178 = vmul.f32 %v130, %v165
  %v179 = vmul.f32 %v147, %v110
  %v180 = vmul.f32 %v151, %v136
  %v181 = vmul.f32 %v155, %v110
  %v182 = vmul.f32 %v159, %v136
  %v183 = vadd.f32 %v175, %v179
  %v184 = vadd.f32 %v176, %v180
  %v185 = vadd.f32 %v177, %v181
  %v186 = vadd.f32 %v178, %v182
  %v187 = vadd.f32 %v85, %v171
  %v188 = vadd.f32 %v86, %v172
  %v189 = vadd.f32 %v87, %v173
  %v190 = vadd.f32 %v88, %v174
  %v191 = vadd.f32 %v97, %v183
  %v192 = vadd.f32 %v98, %v184
  %v193 = vadd.f32 %v99, %v185
  %v194 = vadd.f32 %v100, %v186
  %s195 = scalar_lea.vmem %s0, 2
  %v196 = vld [vmem:[%s195] ss:$4 sm:$0x3]
  %s197 = scalar_lea.vmem %s0, 10
  %v198 = vld [vmem:[%s197] ss:$4 sm:$0x3]
  %s199 = scalar_lea.vmem %s1, 2
  %v200 = vld [vmem:[%s199] ss:$4 sm:$0x3]
  %s201 = scalar_lea.vmem %s1, 10
  %v202 = vld [vmem:[%s201] ss:$4 sm:$0x3]
  %s203 = scalar_lea.vmem %s2, 16
  %v204 = vld [vmem:[%s203] sm:$0xff]
  %s205 = scalar_lea.vmem %s3, 16
  %v206 = vld [vmem:[%s205] sm:$0xff]
  %v209 = vlaneseq
  %v210 = vshrl.u32 %v209, 7
  %v211 = vsub.s32 0, %v210
  %v212 = vrot.slane %v196, %v211
  %v213 = vlaneseq
  %v214 = vshrl.u32 %v213, 7
  %v215 = vsub.s32 1, %v214
  %v216 = vrot.slane %v196, %v215
  %v217 = vlaneseq
  %v218 = vshrl.u32 %v217, 7
  %v219 = vsub.s32 0, %v218
  %v220 = vrot.slane %v198, %v219
  %v221 = vlaneseq
  %v222 = vshrl.u32 %v221, 7
  %v223 = vsub.s32 1, %v222
  %v224 = vrot.slane %v198, %v223
  %v230 = vcombine.high %v204, %v204
  %v232 = vmul.f32 %v212, %v204
  %v233 = vmul.f32 %v216, %v230
  %v234 = vmul.f32 %v220, %v204
  %v235 = vmul.f32 %v224, %v230
  %v238 = vlaneseq
  %v239 = vshrl.u32 %v238, 7
  %v240 = vsub.s32 0, %v239
  %v241 = vrot.slane %v200, %v240
  %v242 = vlaneseq
  %v243 = vshrl.u32 %v242, 7
  %v244 = vsub.s32 1, %v243
  %v245 = vrot.slane %v200, %v244
  %v246 = vlaneseq
  %v247 = vshrl.u32 %v246, 7
  %v248 = vsub.s32 0, %v247
  %v249 = vrot.slane %v202, %v248
  %v250 = vlaneseq
  %v251 = vshrl.u32 %v250, 7
  %v252 = vsub.s32 1, %v251
  %v253 = vrot.slane %v202, %v252
  %v259 = vcombine.high %v206, %v206
  %v261 = vmul.f32 %v241, %v206
  %v262 = vmul.f32 %v245, %v259
  %v263 = vmul.f32 %v249, %v206
  %v264 = vmul.f32 %v253, %v259
  %v265 = vsub.f32 %v232, %v261
  %v266 = vsub.f32 %v233, %v262
  %v267 = vsub.f32 %v234, %v263
  %v268 = vsub.f32 %v235, %v264
  %v269 = vmul.f32 %v212, %v206
  %v270 = vmul.f32 %v216, %v259
  %v271 = vmul.f32 %v220, %v206
  %v272 = vmul.f32 %v224, %v259
  %v273 = vmul.f32 %v241, %v204
  %v274 = vmul.f32 %v245, %v230
  %v275 = vmul.f32 %v249, %v204
  %v276 = vmul.f32 %v253, %v230
  %v277 = vadd.f32 %v269, %v273
  %v278 = vadd.f32 %v270, %v274
  %v279 = vadd.f32 %v271, %v275
  %v280 = vadd.f32 %v272, %v276
  %v281 = vadd.f32 %v187, %v265
  %v282 = vadd.f32 %v188, %v266
  %v283 = vadd.f32 %v189, %v267
  %v284 = vadd.f32 %v190, %v268
  %v285 = vadd.f32 %v191, %v277
  %v286 = vadd.f32 %v192, %v278
  %v287 = vadd.f32 %v193, %v279
  %v288 = vadd.f32 %v194, %v280
  %s289 = scalar_lea.vmem %s0, 3
  %v290 = vld [vmem:[%s289] ss:$4 sm:$0x3]
  %s291 = scalar_lea.vmem %s0, 11
  %v292 = vld [vmem:[%s291] ss:$4 sm:$0x3]
  %s293 = scalar_lea.vmem %s1, 3
  %v294 = vld [vmem:[%s293] ss:$4 sm:$0x3]
  %s295 = scalar_lea.vmem %s1, 11
  %v296 = vld [vmem:[%s295] ss:$4 sm:$0x3]
  %s297 = scalar_lea.vmem %s2, 24
  %v298 = vld [vmem:[%s297] sm:$0xff]
  %s299 = scalar_lea.vmem %s3, 24
  %v300 = vld [vmem:[%s299] sm:$0xff]
  %v303 = vlaneseq
  %v304 = vshrl.u32 %v303, 7
  %v305 = vsub.s32 0, %v304
  %v306 = vrot.slane %v290, %v305
  %v307 = vlaneseq
  %v308 = vshrl.u32 %v307, 7
  %v309 = vsub.s32 1, %v308
  %v310 = vrot.slane %v290, %v309
  %v311 = vlaneseq
  %v312 = vshrl.u32 %v311, 7
  %v313 = vsub.s32 0, %v312
  %v314 = vrot.slane %v292, %v313
  %v315 = vlaneseq
  %v316 = vshrl.u32 %v315, 7
  %v317 = vsub.s32 1, %v316
  %v318 = vrot.slane %v292, %v317
  %v324 = vcombine.high %v298, %v298
  %v326 = vmul.f32 %v306, %v298
  %v327 = vmul.f32 %v310, %v324
  %v328 = vmul.f32 %v314, %v298
  %v329 = vmul.f32 %v318, %v324
  %v332 = vlaneseq
  %v333 = vshrl.u32 %v332, 7
  %v334 = vsub.s32 0, %v333
  %v335 = vrot.slane %v294, %v334
  %v336 = vlaneseq
  %v337 = vshrl.u32 %v336, 7
  %v338 = vsub.s32 1, %v337
  %v339 = vrot.slane %v294, %v338
  %v340 = vlaneseq
  %v341 = vshrl.u32 %v340, 7
  %v342 = vsub.s32 0, %v341
  %v343 = vrot.slane %v296, %v342
  %v344 = vlaneseq
  %v345 = vshrl.u32 %v344, 7
  %v346 = vsub.s32 1, %v345
  %v347 = vrot.slane %v296, %v346
  %v353 = vcombine.high %v300, %v300
  %v355 = vmul.f32 %v335, %v300
  %v356 = vmul.f32 %v339, %v353
  %v357 = vmul.f32 %v343, %v300
  %v358 = vmul.f32 %v347, %v353
  %v359 = vsub.f32 %v326, %v355
  %v360 = vsub.f32 %v327, %v356
  %v361 = vsub.f32 %v328, %v357
  %v362 = vsub.f32 %v329, %v358
  %v363 = vmul.f32 %v306, %v300
  %v364 = vmul.f32 %v310, %v353
  %v365 = vmul.f32 %v314, %v300
  %v366 = vmul.f32 %v318, %v353
  %v367 = vmul.f32 %v335, %v298
  %v368 = vmul.f32 %v339, %v324
  %v369 = vmul.f32 %v343, %v298
  %v370 = vmul.f32 %v347, %v324
  %v371 = vadd.f32 %v363, %v367
  %v372 = vadd.f32 %v364, %v368
  %v373 = vadd.f32 %v365, %v369
  %v374 = vadd.f32 %v366, %v370
  %v375 = vadd.f32 %v281, %v359
  %v376 = vadd.f32 %v282, %v360
  %v377 = vadd.f32 %v283, %v361
  %v378 = vadd.f32 %v284, %v362
  %v379 = vadd.f32 %v285, %v371
  %v380 = vadd.f32 %v286, %v372
  %v381 = vadd.f32 %v287, %v373
  %v382 = vadd.f32 %v288, %v374
  %v387 = vcombine.low %v375, %v376
  %v388 = vcombine.low %v377, %v378
  %391 = vst [vmem:[%s4] sm:$0xff] %v387
  %392 = vst [vmem:[%s4 + $0x8] sm:$0xff] %v388
  %v397 = vcombine.low %v379, %v380
  %v398 = vcombine.low %v381, %v382
  %401 = vst [vmem:[%s5] sm:$0xff] %v397
  %402 = vst [vmem:[%s5 + $0x8] sm:$0xff] %v398
  // Predicated region
  $region18: #{factorized_spectral_conv3d.1} parent=0 // pred_check
    _
  $region19: #{factorized_spectral_conv3d.1} parent=0 // pred_check_branch
    %404 = sbr.rel (0) target = $region21
  $region20: #{factorized_spectral_conv3d.1} parent=0 // pred_region
    _
  $region21: #{factorized_spectral_conv3d.1} parent=0 // pred_fallthru
    _
  // Predicated region
  $region22: #{factorized_spectral_conv3d.1} parent=0 // pred_check
    _
  $region23: #{factorized_spectral_conv3d.1} parent=0 // pred_check_branch
    %406 = sbr.rel (0) target = $region25
  $region24: #{factorized_spectral_conv3d.1} parent=0 // pred_region
    _
  $region25: #{factorized_spectral_conv3d.1} parent=0 // pred_fallthru
    _
  // Predicated region
  $region26: #{factorized_spectral_conv3d.1} parent=0 // pred_check
    _
  $region27: #{factorized_spectral_conv3d.1} parent=0 // pred_check_branch
    %408 = sbr.rel (0) target = $region29
  $region28: #{factorized_spectral_conv3d.1} parent=0 // pred_region
    _
  $region29: #{factorized_spectral_conv3d.1} parent=0 // pred_fallthru
    _
  // Predicated region
  $region30: #{factorized_spectral_conv3d.1} parent=0 // pred_check
    _
  $region31: #{factorized_spectral_conv3d.1} parent=0 // pred_check_branch
    %410 = sbr.rel (0) target = $region33
  $region32: #{factorized_spectral_conv3d.1} parent=0 // pred_region
    _
  $region33: #{factorized_spectral_conv3d.1} parent=0 // pred_fallthru
    _

// kernel: reverse.1
$region0: #{reverse.1}
  #allocation0 [shape = 's32[1]{0}', space=sflag, size = 0x4, scoped, tag = 'scoped memory for reverse.1']
  %s0 = inlined_call_operand.vmem [shape: f32[2,4,16,16,7], index: 0, kind: input, shape index: {}]
  %s1 = inlined_call_operand.vmem [shape: f32[2,4,16,16,7], index: 1, kind: output, shape index: {}]
  %s2 = scalar_lea.vmem %s0, 96
  %v3 = vld [vmem:[%s2] sm:$0xff]
  %4 = vst [vmem:[%s1] sm:$0xff] %v3
  %s5 = scalar_lea.vmem %s0, 544
  %v6 = vld [vmem:[%s5] sm:$0xff]
  %s7 = scalar_lea.vmem %s1, 448
  %8 = vst [vmem:[%s7] sm:$0xff] %v6
  %s9 = scalar_lea.vmem %s0, 208
  %v10 = vld [vmem:[%s9] sm:$0xff]
  %s11 = scalar_lea.vmem %s1, 112
  %12 = vst [vmem:[%s11] sm:$0xff] %v10
  %s13 = scalar_lea.vmem %s0, 656
  %v14 = vld [vmem:[%s13] sm:$0xff]
  %s15 = scalar_lea.vmem %s1, 560
  %16 = vst [vmem:[%s15] sm:$0xff] %v14
  %s17 = scalar_lea.vmem %s0, 320
  %v18 = vld [vmem:[%s17] sm:$0xff]
  %s19 = scalar_lea.vmem %s1, 224
  %20 = vst [vmem:[%s19] sm:$0xff] %v18
  %s21 = scalar_lea.vmem %s0, 768
  %v22 = vld [vmem:[%s21] sm:$0xff]
  %s23 = scalar_lea.vmem %s1, 672
  %24 = vst [vmem:[%s23] sm:$0xff] %v22
  %s25 = scalar_lea.vmem %s0, 432
  %v26 = vld [vmem:[%s25] sm:$0xff]
  %s27 = scalar_lea.vmem %s1, 336
  %28 = vst [vmem:[%s27] sm:$0xff] %v26
  %s29 = scalar_lea.vmem %s0, 880
  %v30 = vld [vmem:[%s29] sm:$0xff]
  %s31 = scalar_lea.vmem %s1, 784
  %32 = vst [vmem:[%s31] sm:$0xff] %v30
  %s33 = scalar_lea.vmem %s0, 80
  %v34 = vld [vmem:[%s33] sm:$0xff]
  %s35 = scalar_lea.vmem %s1, 16
  %36 = vst [vmem:[%s35] sm:$0xff] %v34
  %s37 = scalar_lea.vmem %s0, 528
  %v38 = vld [vmem:[%s37] sm:$0xff]
  %s39 = scalar_lea.vmem %s1, 464
  %40 = vst [vmem:[%s39] sm:$0xff] %v38
  %s41 = scalar_lea.vmem %s0, 192
  %v42 = vld [vmem:[%s41] sm:$0xff]
  %s43 = scalar_lea.vmem %s1, 128
  %44 = vst [vmem:[%s43] sm:$0xff] %v42
  %s45 = scalar_lea.vmem %s0, 640
  %v46 = vld [vmem:[%s45] sm:$0xff]
  %s47 = scalar_lea.vmem %s1, 576
  %48 = vst [vmem:[%s47] sm:$0xff] %v46
  %s49 = scalar_lea.vmem %s0, 304
  %v50 = vld [vmem:[%s49] sm:$0xff]
  %s51 = scalar_lea.vmem %s1, 240
  %52 = vst [vmem:[%s51] sm:$0xff] %v50
  %s53 = scalar_lea.vmem %s0, 752
  %v54 = vld [vmem:[%s53] sm:$0xff]
  %s55 = scalar_lea.vmem %s1, 688
  %56 = vst [vmem:[%s55] sm:$0xff] %v54
  %s57 = scalar_lea.vmem %s0, 416
  %v58 = vld [vmem:[%s57] sm:$0xff]
  %s59 = scalar_lea.vmem %s1, 352
  %60 = vst [vmem:[%s59] sm:$0xff] %v58
  %s61 = scalar_lea.vmem %s0, 864
  %v62 = vld [vmem:[%s61] sm:$0xff]
  %s63 = scalar_lea.vmem %s1, 800
  %64 = vst [vmem:[%s63] sm:$0xff] %v62
  %s65 = scalar_lea.vmem %s0, 64
  %v66 = vld [vmem:[%s65] sm:$0xff]
  %s67 = scalar_lea.vmem %s1, 32
  %68 = vst [vmem:[%s67] sm:$0xff] %v66
  %s69 = scalar_lea.vmem %s0, 512
  %v70 = vld [vmem:[%s69] sm:$0xff]
  %s71 = scalar_lea.vmem %s1, 480
  %72 = vst [vmem:[%s71] sm:$0xff] %v70
  %s73 = scalar_lea.vmem %s0, 176
  %v74 = vld [vmem:[%s73] sm:$0xff]
  %s75 = scalar_lea.vmem %s1, 144
  %76 = vst [vmem:[%s75] sm:$0xff] %v74
  %s77 = scalar_lea.vmem %s0, 624
  %v78 = vld [vmem:[%s77] sm:$0xff]
  %s79 = scalar_lea.vmem %s1, 592
  %80 = vst [vmem:[%s79] sm:$0xff] %v78
  %s81 = scalar_lea.vmem %s0, 288
  %v82 = vld [vmem:[%s81] sm:$0xff]
  %s83 = scalar_lea.vmem %s1, 256
  %84 = vst [vmem:[%s83] sm:$0xff] %v82
  %s85 = scalar_lea.vmem %s0, 736
  %v86 = vld [vmem:[%s85] sm:$0xff]
  %s87 = scalar_lea.vmem %s1, 704
  %88 = vst [vmem:[%s87] sm:$0xff] %v86
  %s89 = scalar_lea.vmem %s0, 400
  %v90 = vld [vmem:[%s89] sm:$0xff]
  %s91 = scalar_lea.vmem %s1, 368
  %92 = vst [vmem:[%s91] sm:$0xff] %v90
  %s93 = scalar_lea.vmem %s0, 848
  %v94 = vld [vmem:[%s93] sm:$0xff]
  %s95 = scalar_lea.vmem %s1, 816
  %96 = vst [vmem:[%s95] sm:$0xff] %v94
  %s97 = scalar_lea.vmem %s0, 48
  %v98 = vld [vmem:[%s97] sm:$0xff]
  %s99 = scalar_lea.vmem %s1, 48
  %100 = vst [vmem:[%s99] sm:$0xff] %v98
  %s101 = scalar_lea.vmem %s0, 496
  %v102 = vld [vmem:[%s101] sm:$0xff]
  %s103 = scalar_lea.vmem %s1, 496
  %104 = vst [vmem:[%s103] sm:$0xff] %v102
  %s105 = scalar_lea.vmem %s0, 160
  %v106 = vld [vmem:[%s105] sm:$0xff]
  %s107 = scalar_lea.vmem %s1, 160
  %108 = vst [vmem:[%s107] sm:$0xff] %v106
  %s109 = scalar_lea.vmem %s0, 608
  %v110 = vld [vmem:[%s109] sm:$0xff]
  %s111 = scalar_lea.vmem %s1, 608
  %112 = vst [vmem:[%s111] sm:$0xff] %v110
  %s113 = scalar_lea.vmem %s0, 272
  %v114 = vld [vmem:[%s113] sm:$0xff]
  %s115 = scalar_lea.vmem %s1, 272
  %116 = vst [vmem:[%s115] sm:$0xff] %v114
  %s117 = scalar_lea.vmem %s0, 720
  %v118 = vld [vmem:[%s117] sm:$0xff]
  %s119 = scalar_lea.vmem %s1, 720
  %120 = vst [vmem:[%s119] sm:$0xff] %v118
  %s121 = scalar_lea.vmem %s0, 384
  %v122 = vld [vmem:[%s121] sm:$0xff]
  %s123 = scalar_lea.vmem %s1, 384
  %124 = vst [vmem:[%s123] sm:$0xff] %v122
  %s125 = scalar_lea.vmem %s0, 832
  %v126 = vld [vmem:[%s125] sm:$0xff]
  %s127 = scalar_lea.vmem %s1, 832
  %128 = vst [vmem:[%s127] sm:$0xff] %v126
  %s129 = scalar_lea.vmem %s0, 32
  %v130 = vld [vmem:[%s129] sm:$0xff]
  %s131 = scalar_lea.vmem %s1, 64
  %132 = vst [vmem:[%s131] sm:$0xff] %v130
  %s133 = scalar_lea.vmem %s0, 480
  %v134 = vld [vmem:[%s133] sm:$0xff]
  %s135 = scalar_lea.vmem %s1, 512
  %136 = vst [vmem:[%s135] sm:$0xff] %v134
  %s137 = scalar_lea.vmem %s0, 144
  %v138 = vld [vmem:[%s137] sm:$0xff]
  %s139 = scalar_lea.vmem %s1, 176
  %140 = vst [vmem:[%s139] sm:$0xff] %v138
  %s141 = scalar_lea.vmem %s0, 592
  %v142 = vld [vmem:[%s141] sm:$0xff]
  %s143 = scalar_lea.vmem %s1, 624
  %144 = vst [vmem:[%s143] sm:$0xff] %v142
  %s145 = scalar_lea.vmem %s0, 256
  %v146 = vld [vmem:[%s145] sm:$0xff]
  %s147 = scalar_lea.vmem %s1, 288
  %148 = vst [vmem:[%s147] sm:$0xff] %v146
  %s149 = scalar_lea.vmem %s0, 704
  %v150 = vld [vmem:[%s149] sm:$0xff]
  %s151 = scalar_lea.vmem %s1, 736
  %152 = vst [vmem:[%s151] sm:$0xff] %v150
  %s153 = scalar_lea.vmem %s0, 368
  %v154 = vld [vmem:[%s153] sm:$0xff]
  %s155 = scalar_lea.vmem %s1, 400
  %156 = vst [vmem:[%s155] sm:$0xff] %v154
  %s157 = scalar_lea.vmem %s0, 816
  %v158 = vld [vmem:[%s157] sm:$0xff]
  %s159 = scalar_lea.vmem %s1, 848
  %160 = vst [vmem:[%s159] sm:$0xff] %v158
  %s161 = scalar_lea.vmem %s0, 16
  %v162 = vld [vmem:[%s161] sm:$0xff]
  %s163 = scalar_lea.vmem %s1, 80
  %164 = vst [vmem:[%s163] sm:$0xff] %v162
  %s165 = scalar_lea.vmem %s0, 464
  %v166 = vld [vmem:[%s165] sm:$0xff]
  %s167 = scalar_lea.vmem %s1, 528
  %168 = vst [vmem:[%s167] sm:$0xff] %v166
  %s169 = scalar_lea.vmem %s0, 128
  %v170 = vld [vmem:[%s169] sm:$0xff]
  %s171 = scalar_lea.vmem %s1, 192
  %172 = vst [vmem:[%s171] sm:$0xff] %v170
  %s173 = scalar_lea.vmem %s0, 576
  %v174 = vld [vmem:[%s173] sm:$0xff]
  %s175 = scalar_lea.vmem %s1, 640
  %176 = vst [vmem:[%s175] sm:$0xff] %v174
  %s177 = scalar_lea.vmem %s0, 240
  %v178 = vld [vmem:[%s177] sm:$0xff]
  %s179 = scalar_lea.vmem %s1, 304
  %180 = vst [vmem:[%s179] sm:$0xff] %v178
  %s181 = scalar_lea.vmem %s0, 688
  %v182 = vld [vmem:[%s181] sm:$0xff]
  %s183 = scalar_lea.vmem %s1, 752
  %184 = vst [vmem:[%s183] sm:$0xff] %v182
  %s185 = scalar_lea.vmem %s0, 352
  %v186 = vld [vmem:[%s185] sm:$0xff]
  %s187 = scalar_lea.vmem %s1, 416
  %188 = vst [vmem:[%s187] sm:$0xff] %v186
  %s189 = scalar_lea.vmem %s0, 800
  %v190 = vld [vmem:[%s189] sm:$0xff]
  %s191 = scalar_lea.vmem %s1, 864
  %192 = vst [vmem:[%s191] sm:$0xff] %v190
  %v193 = vld [vmem:[%s0] sm:$0xff]
  %s194 = scalar_lea.vmem %s1, 96
  %195 = vst [vmem:[%s194] sm:$0xff] %v193
  %s196 = scalar_lea.vmem %s0, 448
  %v197 = vld [vmem:[%s196] sm:$0xff]
  %s198 = scalar_lea.vmem %s1, 544
  %199 = vst [vmem:[%s198] sm:$0xff] %v197
  %s200 = scalar_lea.vmem %s0, 112
  %v201 = vld [vmem:[%s200] sm:$0xff]
  %s202 = scalar_lea.vmem %s1, 208
  %203 = vst [vmem:[%s202] sm:$0xff] %v201
  %s204 = scalar_lea.vmem %s0, 560
  %v205 = vld [vmem:[%s204] sm:$0xff]
  %s206 = scalar_lea.vmem %s1, 656
  %207 = vst [vmem:[%s206] sm:$0xff] %v205
  %s208 = scalar_lea.vmem %s0, 224
  %v209 = vld [vmem:[%s208] sm:$0xff]
  %s210 = scalar_lea.vmem %s1, 320
  %211 = vst [vmem:[%s210] sm:$0xff] %v209
  %s212 = scalar_lea.vmem %s0, 672
  %v213 = vld [vmem:[%s212] sm:$0xff]
  %s214 = scalar_lea.vmem %s1, 768
  %215 = vst [vmem:[%s214] sm:$0xff] %v213
  %s216 = scalar_lea.vmem %s0, 336
  %v217 = vld [vmem:[%s216] sm:$0xff]
  %s218 = scalar_lea.vmem %s1, 432
  %219 = vst [vmem:[%s218] sm:$0xff] %v217
  %s220 = scalar_lea.vmem %s0, 784
  %v221 = vld [vmem:[%s220] sm:$0xff]
  %s222 = scalar_lea.vmem %s1, 880
  %223 = vst [vmem:[%s222] sm:$0xff] %v221
  %s224 = scalar_lea.vmem %s0, 104
  %v225 = vld [vmem:[%s224] sm:$0xff]
  %s226 = scalar_lea.vmem %s1, 8
  %227 = vst [vmem:[%s226] sm:$0xff] %v225
  %s228 = scalar_lea.vmem %s0, 552
  %v229 = vld [vmem:[%s228] sm:$0xff]
  %s230 = scalar_lea.vmem %s1, 456
  %231 = vst [vmem:[%s230] sm:$0xff] %v229
  %s232 = scalar_lea.vmem %s0, 216
  %v233 = vld [vmem:[%s232] sm:$0xff]
  %s234 = scalar_lea.vmem %s1, 120
  %235 = vst [vmem:[%s234] sm:$0xff] %v233
  %s236 = scalar_lea.vmem %s0, 664
  %v237 = vld [vmem:[%s236] sm:$0xff]
  %s238 = scalar_lea.vmem %s1, 568
  %239 = vst [vmem:[%s238] sm:$0xff] %v237
  %s240 = scalar_lea.vmem %s0, 328
  %v241 = vld [vmem:[%s240] sm:$0xff]
  %s242 = scalar_lea.vmem %s1, 232
  %243 = vst [vmem:[%s242] sm:$0xff] %v241
  %s244 = scalar_lea.vmem %s0, 776
  %v245 = vld [vmem:[%s244] sm:$0xff]
  %s246 = scalar_lea.vmem %s1, 680
  %247 = vst [vmem:[%s246] sm:$0xff] %v245
  %s248 = scalar_lea.vmem %s0, 440
  %v249 = vld [vmem:[%s248] sm:$0xff]
  %s250 = scalar_lea.vmem %s1, 344
  %251 = vst [vmem:[%s250] sm:$0xff] %v249
  %s252 = scalar_lea.vmem %s0, 888
  %v253 = vld [vmem:[%s252] sm:$0xff]
  %s254 = scalar_lea.vmem %s1, 792
  %255 = vst [vmem:[%s254] sm:$0xff] %v253
  %s256 = scalar_lea.vmem %s0, 88
  %v257 = vld [vmem:[%s256] sm:$0xff]
  %s258 = scalar_lea.vmem %s1, 24
  %259 = vst [vmem:[%s258] sm:$0xff] %v257
  %s260 = scalar_lea.vmem %s0, 536
  %v261 = vld [vmem:[%s260] sm:$0xff]
  %s262 = scalar_lea.vmem %s1, 472
  %263 = vst [vmem:[%s262] sm:$0xff] %v261
  %s264 = scalar_lea.vmem %s0, 200
  %v265 = vld [vmem:[%s264] sm:$0xff]
  %s266 = scalar_lea.vmem %s1, 136
  %267 = vst [vmem:[%s266] sm:$0xff] %v265
  %s268 = scalar_lea.vmem %s0, 648
  %v269 = vld [vmem:[%s268] sm:$0xff]
  %s270 = scalar_lea.vmem %s1, 584
  %271 = vst [vmem:[%s270] sm:$0xff] %v269
  %s272 = scalar_lea.vmem %s0, 312
  %v273 = vld [vmem:[%s272] sm:$0xff]
  %s274 = scalar_lea.vmem %s1, 248
  %275 = vst [vmem:[%s274] sm:$0xff] %v273
  %s276 = scalar_lea.vmem %s0, 760
  %v277 = vld [vmem:[%s276] sm:$0xff]
  %s278 = scalar_lea.vmem %s1, 696
  %279 = vst [vmem:[%s278] sm:$0xff] %v277
  %s280 = scalar_lea.vmem %s0, 424
  %v281 = vld [vmem:[%s280] sm:$0xff]
  %s282 = scalar_lea.vmem %s1, 360
  %283 = vst [vmem:[%s282] sm:$0xff] %v281
  %s284 = scalar_lea.vmem %s0, 872
  %v285 = vld [vmem:[%s284] sm:$0xff]
  %s286 = scalar_lea.vmem %s1, 808
  %287 = vst [vmem:[%s286] sm:$0xff] %v285
  %s288 = scalar_lea.vmem %s0, 72
  %v289 = vld [vmem:[%s288] sm:$0xff]
  %s290 = scalar_lea.vmem %s1, 40
  %291 = vst [vmem:[%s290] sm:$0xff] %v289
  %s292 = scalar_lea.vmem %s0, 520
  %v293 = vld [vmem:[%s292] sm:$0xff]
  %s294 = scalar_lea.vmem %s1, 488
  %295 = vst [vmem:[%s294] sm:$0xff] %v293
  %s296 = scalar_lea.vmem %s0, 184
  %v297 = vld [vmem:[%s296] sm:$0xff]
  %s298 = scalar_lea.vmem %s1, 152
  %299 = vst [vmem:[%s298] sm:$0xff] %v297
  %s300 = scalar_lea.vmem %s0, 632
  %v301 = vld [vmem:[%s300] sm:$0xff]
  %s302 = scalar_lea.vmem %s1, 600
  %303 = vst [vmem:[%s302] sm:$0xff] %v301
  %s304 = scalar_lea.vmem %s0, 296
  %v305 = vld [vmem:[%s304] sm:$0xff]
  %s306 = scalar_lea.vmem %s1, 264
  %307 = vst [vmem:[%s306] sm:$0xff] %v305
  %s308 = scalar_lea.vmem %s0, 744
  %v309 = vld [vmem:[%s308] sm:$0xff]
  %s310 = scalar_lea.vmem %s1, 712
  %311 = vst [vmem:[%s310] sm:$0xff] %v309
  %s312 = scalar_lea.vmem %s0, 408
  %v313 = vld [vmem:[%s312] sm:$0xff]
  %s314 = scalar_lea.vmem %s1, 376
  %315 = vst [vmem:[%s314] sm:$0xff] %v313
  %s316 = scalar_lea.vmem %s0, 856
  %v317 = vld [vmem:[%s316] sm:$0xff]
  %s318 = scalar_lea.vmem %s1, 824
  %319 = vst [vmem:[%s318] sm:$0xff] %v317
  %s320 = scalar_lea.vmem %s0, 56
  %v321 = vld [vmem:[%s320] sm:$0xff]
  %s322 = scalar_lea.vmem %s1, 56
  %323 = vst [vmem:[%s322] sm:$0xff] %v321
  %s324 = scalar_lea.vmem %s0, 504
  %v325 = vld [vmem:[%s324] sm:$0xff]
  %s326 = scalar_lea.vmem %s1, 504
  %327 = vst [vmem:[%s326] sm:$0xff] %v325
  %s328 = scalar_lea.vmem %s0, 168
  %v329 = vld [vmem:[%s328] sm:$0xff]
  %s330 = scalar_lea.vmem %s1, 168
  %331 = vst [vmem:[%s330] sm:$0xff] %v329
  %s332 = scalar_lea.vmem %s0, 616
  %v333 = vld [vmem:[%s332] sm:$0xff]
  %s334 = scalar_lea.vmem %s1, 616
  %335 = vst [vmem:[%s334] sm:$0xff] %v333
  %s336 = scalar_lea.vmem %s0, 280
  %v337 = vld [vmem:[%s336] sm:$0xff]
  %s338 = scalar_lea.vmem %s1, 280
  %339 = vst [vmem:[%s338] sm:$0xff] %v337
  %s340 = scalar_lea.vmem %s0, 728
  %v341 = vld [vmem:[%s340] sm:$0xff]
  %s342 = scalar_lea.vmem %s1, 728
  %343 = vst [vmem:[%s342] sm:$0xff] %v341
  %s344 = scalar_lea.vmem %s0, 392
  %v345 = vld [vmem:[%s344] sm:$0xff]
  %s346 = scalar_lea.vmem %s1, 392
  %347 = vst [vmem:[%s346] sm:$0xff] %v345
  %s348 = scalar_lea.vmem %s0, 840
  %v349 = vld [vmem:[%s348] sm:$0xff]
  %s350 = scalar_lea.vmem %s1, 840
  %351 = vst [vmem:[%s350] sm:$0xff] %v349
  %s352 = scalar_lea.vmem %s0, 40
  %v353 = vld [vmem:[%s352] sm:$0xff]
  %s354 = scalar_lea.vmem %s1, 72
  %355 = vst [vmem:[%s354] sm:$0xff] %v353
  %s356 = scalar_lea.vmem %s0, 488
  %v357 = vld [vmem:[%s356] sm:$0xff]
  %s358 = scalar_lea.vmem %s1, 520
  %359 = vst [vmem:[%s358] sm:$0xff] %v357
  %s360 = scalar_lea.vmem %s0, 152
  %v361 = vld [vmem:[%s360] sm:$0xff]
  %s362 = scalar_lea.vmem %s1, 184
  %363 = vst [vmem:[%s362] sm:$0xff] %v361
  %s364 = scalar_lea.vmem %s0, 600
  %v365 = vld [vmem:[%s364] sm:$0xff]
  %s366 = scalar_lea.vmem %s1, 632
  %367 = vst [vmem:[%s366] sm:$0xff] %v365
  %s368 = scalar_lea.vmem %s0, 264
  %v369 = vld [vmem:[%s368] sm:$0xff]
  %s370 = scalar_lea.vmem %s1, 296
  %371 = vst [vmem:[%s370] sm:$0xff] %v369
  %s372 = scalar_lea.vmem %s0, 712
  %v373 = vld [vmem:[%s372] sm:$0xff]
  %s374 = scalar_lea.vmem %s1, 744
  %375 = vst [vmem:[%s374] sm:$0xff] %v373
  %s376 = scalar_lea.vmem %s0, 376
  %v377 = vld [vmem:[%s376] sm:$0xff]
  %s378 = scalar_lea.vmem %s1, 408
  %379 = vst [vmem:[%s378] sm:$0xff] %v377
  %s380 = scalar_lea.vmem %s0, 824
  %v381 = vld [vmem:[%s380] sm:$0xff]
  %s382 = scalar_lea.vmem %s1, 856
  %383 = vst [vmem:[%s382] sm:$0xff] %v381
  %s384 = scalar_lea.vmem %s0, 24
  %v385 = vld [vmem:[%s384] sm:$0xff]
  %s386 = scalar_lea.vmem %s1, 88
  %387 = vst [vmem:[%s386] sm:$0xff] %v385
  %s388 = scalar_lea.vmem %s0, 472
  %v389 = vld [vmem:[%s388] sm:$0xff]
  %s390 = scalar_lea.vmem %s1, 536
  %391 = vst [vmem:[%s390] sm:$0xff] %v389
  %s392 = scalar_lea.vmem %s0, 136
  %v393 = vld [vmem:[%s392] sm:$0xff]
  %s394 = scalar_lea.vmem %s1, 200
  %395 = vst [vmem:[%s394] sm:$0xff] %v393
  %s396 = scalar_lea.vmem %s0, 584
  %v397 = vld [vmem:[%s396] sm:$0xff]
  %s398 = scalar_lea.vmem %s1, 648
  %399 = vst [vmem:[%s398] sm:$0xff] %v397
  %s400 = scalar_lea.vmem %s0, 248
  %v401 = vld [vmem:[%s400] sm:$0xff]
  %s402 = scalar_lea.vmem %s1, 312
  %403 = vst [vmem:[%s402] sm:$0xff] %v401
  %s404 = scalar_lea.vmem %s0, 696
  %v405 = vld [vmem:[%s404] sm:$0xff]
  %s406 = scalar_lea.vmem %s1, 760
  %407 = vst [vmem:[%s406] sm:$0xff] %v405
  %s408 = scalar_lea.vmem %s0, 360
  %v409 = vld [vmem:[%s408] sm:$0xff]
  %s410 = scalar_lea.vmem %s1, 424
  %411 = vst [vmem:[%s410] sm:$0xff] %v409
  %s412 = scalar_lea.vmem %s0, 808
  %v413 = vld [vmem:[%s412] sm:$0xff]
  %s414 = scalar_lea.vmem %s1, 872
  %415 = vst [vmem:[%s414] sm:$0xff] %v413
  %s416 = scalar_lea.vmem %s0, 8
  %v417 = vld [vmem:[%s416] sm:$0xff]
  %s418 = scalar_lea.vmem %s1, 104
  %419 = vst [vmem:[%s418] sm:$0xff] %v417
  %s420 = scalar_lea.vmem %s0, 456
  %v421 = vld [vmem:[%s420] sm:$0xff]
  %s422 = scalar_lea.vmem %s1, 552
  %423 = vst [vmem:[%s422] sm:$0xff] %v421
  %s424 = scalar_lea.vmem %s0, 120
  %v425 = vld [vmem:[%s424] sm:$0xff]
  %s426 = scalar_lea.vmem %s1, 216
  %427 = vst [vmem:[%s426] sm:$0xff] %v425
  %s428 = scalar_lea.vmem %s0, 568
  %v429 = vld [vmem:[%s428] sm:$0xff]
  %s430 = scalar_lea.vmem %s1, 664
  %431 = vst [vmem:[%s430] sm:$0xff] %v429
  %s432 = scalar_lea.vmem %s0, 232
  %v433 = vld [vmem:[%s432] sm:$0xff]
  %s434 = scalar_lea.vmem %s1, 328
  %435 = vst [vmem:[%s434] sm:$0xff] %v433
  %s436 = scalar_lea.vmem %s0, 680
  %v437 = vld [vmem:[%s436] sm:$0xff]
  %s438 = scalar_lea.vmem %s1, 776
  %439 = vst [vmem:[%s438] sm:$0xff] %v437
  %s440 = scalar_lea.vmem %s0, 344
  %v441 = vld [vmem:[%s440] sm:$0xff]
  %s442 = scalar_lea.vmem %s1, 440
  %443 = vst [vmem:[%s442] sm:$0xff] %v441
  %s444 = scalar_lea.vmem %s0, 792
  %v445 = vld [vmem:[%s444] sm:$0xff]
  %s446 = scalar_lea.vmem %s1, 888
  %447 = vst [vmem:[%s446] sm:$0xff] %v445

</llo_original>
